<compile_context>
chip_gen: v5e
topology: v5e:2x2
jax: 0.10.0
libtpu: 0.0.40
codegen_flags: <defaults>
</compile_context>

<pallas_src>
import functools

import jax
import jax.numpy as jnp
from jax.experimental import pallas as pl
from jax.experimental.pallas import tpu as pltpu


def _patch_embed_kernel(x_ref, w_ref, b_ref, o_ref):
    # x_ref: (tm, K)  w_ref: (K, tn)  b_ref: (1, tn)  o_ref: (tm, tn)
    acc = jnp.dot(x_ref[...], w_ref[...], preferred_element_type=jnp.float32)
    o_ref[...] = (acc + b_ref[...]).astype(o_ref.dtype)


def _round_up(x, m):
    return ((x + m - 1) // m) * m


def _largest_divisor_tile(n, max_tile, align):
    """Largest multiple of `align` that divides n and is <= max_tile, or None."""
    t = (max_tile // align) * align
    while t >= align:
        if n % t == 0:
            return t
        t -= align
    return None


def _vmem_plan():
    """(tile budget bytes, vmem_limit_bytes), gated by TPU generation."""
    try:
        cap = int(pltpu.get_tpu_info().vmem_capacity_bytes)
    except Exception:                       # conservative fallback (v7x-sized)
        cap = 64 * 1024 * 1024
    if cap <= 64 * 1024 * 1024:             # v7x: 64 MiB physical VMEM, 2 TCs
        return 44 * 1024 * 1024, 50 * 1024 * 1024
    return 56 * 1024 * 1024, 64 * 1024 * 1024   # v5e / v6e: 128 MiB physical


def _select_tiles(M, K_pad, N, comp_bytes, out_bytes, vmem_budget):
    # --- N tiling: keep the whole (K, N) weight resident whenever cheap ----
    # (constant block index -> Pallas fetches it exactly once).
    w_full = 2 * K_pad * N * comp_bytes
    if w_full <= vmem_budget // 3 or N % 128 != 0:
        tn = N
    else:
        tn = (_largest_divisor_tile(N, 512, 256)      # v6e/v7x MXU is 256 wide
              or _largest_divisor_tile(N, 512, 128)   # v5e MXU is 128 wide
              or N)
    w_bytes = 2 * K_pad * tn * comp_bytes
    # --- M tiling: biggest tile whose double-buffered footprint fits -------
    tm = 128
    for cand in (1024, 512, 256, 128):
        tot = w_bytes + 2 * cand * K_pad * comp_bytes + 2 * cand * tn * out_bytes
        if tot <= vmem_budget:
            tm = cand
            break
    # Small inputs: keep >= 2 grid steps on the parallel M axis so pipelining
    # and megacore sharding (2 TensorCores on v7x) still kick in.
    if M < 2 * tm:
        tm = max(8, _round_up((M + 1) // 2, 8))
    return tm, tn


@functools.partial(jax.jit,
                   static_argnames=("patch_size", "compute_dtype", "out_dtype"))
def patch_embed(x, weight, bias, *, patch_size, compute_dtype=jnp.bfloat16,
                out_dtype=None):
    """ViT patch embedding (Conv2d with kernel == stride == patch_size).

    x:      (B, C, H, W) NCHW, like PyTorch.
    weight: (embed_dim, C, ph, pw)   bias: (embed_dim,)
    Returns (tokens, (Hp, Wp)); tokens: (B, Hp*Wp, embed_dim).
    """
    ph = pw = patch_size
    B, C, H, W = x.shape
    E = weight.shape[0]
    Hp, Wp = H // ph, W // pw
    K = C * ph * pw
    K_pad = _round_up(K, 128)               # lane-dense contraction dim
    M = B * Hp * Wp
    N = E
    out_dtype = x.dtype if out_dtype is None else out_dtype
    comp_bytes = jnp.dtype(compute_dtype).itemsize
    o_bytes = jnp.dtype(out_dtype).itemsize

    # --- glue: im2col in the compute dtype (single XLA pass; see TODO) -----
    patches = x.astype(compute_dtype)
    patches = patches.reshape(B, C, Hp, ph, Wp, pw)
    patches = patches.transpose(0, 2, 4, 1, 3, 5)          # (B, Hp, Wp, C, ph, pw)
    patches = patches.reshape(M, K)
    if K_pad != K:
        patches = jnp.pad(patches, ((0, 0), (0, K_pad - K)))

    # Conv weight (E, C, ph, pw) -> (K, E): tiny transpose outside the kernel,
    # puts N in the RHS lane dim (MXU-native streaming).  Zero-padded K rows
    # contribute nothing to the dot.  Bias stays f32, added in f32.
    w_mat = weight.reshape(E, K).T.astype(compute_dtype)
    if K_pad != K:
        w_mat = jnp.pad(w_mat, ((0, K_pad - K), (0, 0)))
    b_row = bias.reshape(1, N).astype(jnp.float32)

    # --- tiling & VMEM budget (per generation) ------------------------------
    vmem_budget, vmem_limit = _vmem_plan()
    tm, tn = _select_tiles(M, K_pad, N, comp_bytes, o_bytes, vmem_budget)
    grid = (pl.cdiv(M, tm), N // tn)        # ragged last M block is masked

    out = pl.pallas_call(
        _patch_embed_kernel,
        out_shape=jax.ShapeDtypeStruct((M, N), out_dtype),
        grid_spec=pltpu.PrefetchScalarGridSpec(
            num_scalar_prefetch=0,
            grid=grid,
            in_specs=[
                pl.BlockSpec((tm, K_pad), lambda i, j: (i, 0)),   # patch rows
                pl.BlockSpec((K_pad, tn), lambda i, j: (0, j)),   # weight (resident if tn==N)
                pl.BlockSpec((1, tn), lambda i, j: (0, j)),       # bias
            ],
            out_specs=pl.BlockSpec((tm, tn), lambda i, j: (i, j)),
        ),
        compiler_params=pltpu.CompilerParams(
            dimension_semantics=("parallel", "parallel"),
            vmem_limit_bytes=vmem_limit,
        ),
    )(patches, w_mat, b_row)

    tokens = out.reshape(B, Hp * Wp, E)
    return tokens, (Hp, Wp)


if __name__ == "__main__":
    def conv_ref(x, weight, bias, patch_size):
        ref = jax.lax.conv_general_dilated(
            x, weight, window_strides=(patch_size, patch_size), padding="VALID",
            dimension_numbers=("NCHW", "OIHW", "NCHW"))
        ref = ref + bias[None, :, None, None]
        Bb, Ee, Hh, Ww = ref.shape
        return ref.reshape(Bb, Ee, Hh * Ww).transpose(0, 2, 1)

    # Config 1: B=2, C=4, H=W=16, patch=4 -> Hp=Wp=4, M=32, K=64->128, E=128.
    B, C, H, W, P, E = 2, 4, 16, 16, 4, 128
    kx, kw, kb = jax.random.split(jax.random.PRNGKey(0), 3)
    x = jax.random.normal(kx, (B, C, H, W), dtype=jnp.float32)
    fan_in = C * P * P
    bound = 1.0 / (fan_in ** 0.5)                     # Conv2d default init scale
    weight = jax.random.uniform(kw, (E, C, P, P), dtype=jnp.float32,
                                minval=-bound, maxval=bound)
    bias = jax.random.uniform(kb, (E,), dtype=jnp.float32,
                              minval=-bound, maxval=bound)
    ref = conv_ref(x, weight, bias, P)

    # Fast path: bf16 operands, f32 MXU accumulation.
    tokens, (Hp, Wp) = patch_embed(x, weight, bias, patch_size=P)
    tokens = jax.block_until_ready(tokens)
    assert tokens.shape == (B, (H // P) * (W // P), E)
    assert (int(Hp), int(Wp)) == (H // P, W // P)
    assert jnp.allclose(tokens, ref, atol=5e-2, rtol=5e-2)     # bf16 tolerance

    # Full-f32 path through the same kernel: tight check vs. the conv ref.
    tokens_f32, _ = patch_embed(x, weight, bias, patch_size=P,
                                compute_dtype=jnp.float32)
    tokens_f32 = jax.block_until_ready(tokens_f32)
    assert jnp.allclose(tokens_f32, ref, atol=1e-4, rtol=1e-4)

    # Config 2: exercises the ragged last M block (M=25 not a tile multiple),
    # padded K (48 -> 128) and a non-128 embed dim (lane-masked stores).
    B2, C2, H2, W2, P2, E2 = 1, 3, 20, 20, 4, 96
    kx2, kw2, kb2 = jax.random.split(jax.random.PRNGKey(1), 3)
    x2 = jax.random.normal(kx2, (B2, C2, H2, W2), dtype=jnp.float32)
    w2 = jax.random.normal(kw2, (E2, C2, P2, P2), dtype=jnp.float32) * 0.05
    b2 = jax.random.normal(kb2, (E2,), dtype=jnp.float32) * 0.05
    ref2 = conv_ref(x2, w2, b2, P2)
    tok2, (Hp2, Wp2) = patch_embed(x2, w2, b2, patch_size=P2,
                                   compute_dtype=jnp.float32)
    tok2 = jax.block_until_ready(tok2)
    assert tok2.shape == (B2, (H2 // P2) * (W2 // P2), E2)
    assert (int(Hp2), int(Wp2)) == (H2 // P2, W2 // P2)
    assert jnp.allclose(tok2, ref2, atol=1e-4, rtol=1e-4)

    print("KERNEL_OK")
</pallas_src>

<mosaic_0001>
module attributes {stable_mosaic.version = 11 : i64} {
  func.func @_patch_embed_kernel(%arg0: i32, %arg1: i32, %arg2: memref<16x128xbf16, #tpu.memory_space<vmem>>, %arg3: memref<128x128xbf16, #tpu.memory_space<vmem>>, %arg4: memref<1x128xf32, #tpu.memory_space<vmem>>, %arg5: memref<16x128xf32, #tpu.memory_space<vmem>>) attributes {dimension_semantics = [#tpu.dimension_semantics<parallel>, #tpu.dimension_semantics<parallel>], iteration_bounds = array<i64: 2, 1>, scalar_prefetch = 0 : i64, scratch_operands = 0 : i64, tpu.core_type = #tpu.core_type<tc>, window_params = [{transform_indices = @transform_0, window_bounds = array<i64: 16, 128>}, {transform_indices = @transform_1, window_bounds = array<i64: 128, 128>}, {transform_indices = @transform_2, window_bounds = array<i64: 1, 128>}, {transform_indices = @transform_3, window_bounds = array<i64: 16, 128>}]} {
    %c0 = arith.constant 0 : index
    %c0_0 = arith.constant 0 : index
    %0 = vector.load %arg2[%c0, %c0_0] : memref<16x128xbf16, #tpu.memory_space<vmem>>, vector<16x128xbf16>
    %c0_1 = arith.constant 0 : index
    %c0_2 = arith.constant 0 : index
    %1 = vector.load %arg3[%c0_1, %c0_2] : memref<128x128xbf16, #tpu.memory_space<vmem>>, vector<128x128xbf16>
    %cst = arith.constant dense<0.000000e+00> : vector<16x128xf32>
    %2 = tpu.matmul %0, %1, %cst {dimension_numbers = #tpu.dot_dimension_numbers<[1], [0], [0], [1], [0, 0, 1, 1], [], []>} : vector<16x128xbf16>, vector<128x128xbf16>, vector<16x128xf32> -> vector<16x128xf32>
    %c0_3 = arith.constant 0 : index
    %c0_4 = arith.constant 0 : index
    %3 = vector.load %arg4[%c0_3, %c0_4] : memref<1x128xf32, #tpu.memory_space<vmem>>, vector<1x128xf32>
    %4 = vector.broadcast %3 : vector<1x128xf32> to vector<16x128xf32>
    %5 = arith.addf %2, %4 : vector<16x128xf32>
    %c0_5 = arith.constant 0 : index
    %c0_6 = arith.constant 0 : index
    %6 = vector.load %arg5[%c0_5, %c0_6] : memref<16x128xf32, #tpu.memory_space<vmem>>, vector<16x128xf32>
    tpu.vector_store %arg5[%c0_5, %c0_6], %5 {strides = array<i32>} : memref<16x128xf32, #tpu.memory_space<vmem>>, vector<16x128xf32>,
    return
  }
  func.func @transform_0(%arg0: i32, %arg1: i32) -> (i32, i32) {
    %c0_i32 = arith.constant 0 : i32
    %c0_i32_0 = arith.constant 0 : i32
    return %arg0, %c0_i32 : i32, i32
  }
  func.func @transform_1(%arg0: i32, %arg1: i32) -> (i32, i32) {
    %c0_i32 = arith.constant 0 : i32
    %c0_i32_0 = arith.constant 0 : i32
    return %c0_i32, %arg1 : i32, i32
  }
  func.func @transform_2(%arg0: i32, %arg1: i32) -> (i32, i32) {
    %c0_i32 = arith.constant 0 : i32
    %c0_i32_0 = arith.constant 0 : i32
    return %c0_i32, %arg1 : i32, i32
  }
  func.func @transform_3(%arg0: i32, %arg1: i32) -> (i32, i32) {
    %c0_i32 = arith.constant 0 : i32
    return %arg0, %arg1 : i32, i32
  }
}

</mosaic_0001>

<llo_original>
// kernel: patch_embed.1
$region0: #{patch_embed.1}
  #allocation0 [shape = 'u32[]', space=smem, size = 0x4, offset = 0x4, fixed_abs, tag = 'smem constant byte address 0x4 - core index']
  #allocation1 [shape = 'u32[72,128]{1,0:T(1,128)}', space=vmem, size = 0x9000, scoped, tag = 'internal scratch']
  %s0 = inlined_call_operand.vmem [shape: bf16[32,128], index: 0, kind: input, shape index: {}]
  %s1 = inlined_call_operand.vmem [shape: bf16[128,128], index: 1, kind: input, shape index: {}]
  %s2 = inlined_call_operand.vmem [shape: f32[1,128], index: 2, kind: input, shape index: {}]
  %s3 = inlined_call_operand.hbm [shape: f32[32,128], index: 3, kind: output, shape index: {}]
  %s4 = sld [smem:[#allocation0]]
  $region45: #{patch_embed.1} parent=0
    _
  %s6 = ssub.s32 1, %s4
  %s7 = scalar_select 0, %s6, %s4
  $region1: #{patch_embed.1} parent=0
    #allocation2 [shape = 'u8[16384]{0}', space=vmem, size = 0x4000, scoped, tag = 'output window, operand 0']
    #allocation3 [shape = 's32[2]{0}', space=sflag, size = 0x8, scoped, tag = 'scoped memory for patch_embed.1']
    %8 = vsyncpa [#allocation3], 0
    %s9 = scalar_lea.sflag [#allocation3], 1
    %10 = vsyncpa %s9, 0
    loop: start=0, step=1, limit=4
    $region2: #{patch_embed.1} parent=1 // loop_pre_header
      _
    $region3: #{patch_embed.1} parent=1 // loop_header
      %s12 = sphi 0, %s16
      %p13 = scmp.ge.s32.totalorder %s12, 4
      %s19 = sphi 0, %s31
      %s20 = sphi 0, %s27
      %s21 = sphi 0, %s19
      %s22 = sphi 0, %s20
      %s23 = sphi 0, %s21
      %s24 = sphi 0, %s22
      %s34 = sphi 0, %s36
      %s37 = sphi 0, %s34
      %s38 = sphi 0, %s37
      %s54 = sphi 0, %s38
      %s60 = sphi 0, %s62
      %s63 = sphi 0, %s60
      %s64 = sphi 0, %s63
      %s80 = sphi 0, %s64
      %s86 = sphi 0, %s88
      %s89 = sphi 0, %s86
      %s90 = sphi 0, %s89
      %s106 = sphi 0, %s90
      %s114 = sphi 0, %s116
      %s117 = sphi 0, %s114
      %s118 = sphi 0, %s117
      %s134 = sphi 0, %s118
    $region4: #{patch_embed.1} parent=1 // loop_header_branch
      %15 = sbr.rel (%p13) target = $region8
    $region5: #{patch_embed.1} parent=1 // loop_body
      %s17 = ssub.s32 %s12, 1
      %s18 = ssub.s32 %s12, 2
      %s25 = sadd.s32 1, %s20
      %p26 = scmp.ge.s32.totalorder %s25, 1
      %s27 = scalar_select %p26, 0, %s25
      %s28 = sadd.s32 1, %s19
      %s29 = scalar_select %p26, %s28, %s19
      %p30 = scmp.ge.s32.totalorder %s29, 2
      %s31 = scalar_select %p30, 0, %s29
      %s32 = ssub.s32 %s19, %s31
      %p33 = scmp.eq.s32.totalorder %s32, 0
      %s35 = sadd.s32 %s34, 1
      %s36 = scalar_select %p33, %s34, %s35
      %p39 = pneg %p33
      %p40 = scmp.eq.s32.totalorder %s12, 1
      %p41 = por %p39, %p40
      %p42 = scmp.ne.s32.totalorder %s34, %s37
      %p43 = scmp.eq.s32.totalorder %s12, 0
      %p44 = por %p42, %p43
      %p45 = scmp.ne.s32.totalorder %s34, %s37
      %p46 = scmp.eq.s32.totalorder %s17, 1
      %p47 = por %p45, %p46
      %p48 = scmp.ne.s32.totalorder %s37, %s38
      %p49 = scmp.eq.s32.totalorder %s17, 0
      %p50 = por %p48, %p49
      %p51 = scmp.ne.s32.totalorder %s37, %s38
      %p52 = scmp.eq.s32.totalorder %s18, 1
      %p53 = por %p51, %p52
      %p55 = scmp.ne.s32.totalorder %s38, %s54
      %p56 = scmp.eq.s32.totalorder %s18, 0
      %p57 = por %p55, %p56
      %s58 = ssub.s32 %s20, %s27
      %p59 = scmp.eq.s32.totalorder %s58, 0
      %s61 = sadd.s32 %s60, 1
      %s62 = scalar_select %p59, %s60, %s61
      %p65 = pneg %p59
      %p66 = scmp.eq.s32.totalorder %s12, 1
      %p67 = por %p65, %p66
      %p68 = scmp.ne.s32.totalorder %s60, %s63
      %p69 = scmp.eq.s32.totalorder %s12, 0
      %p70 = por %p68, %p69
      %p71 = scmp.ne.s32.totalorder %s60, %s63
      %p72 = scmp.eq.s32.totalorder %s17, 1
      %p73 = por %p71, %p72
      %p74 = scmp.ne.s32.totalorder %s63, %s64
      %p75 = scmp.eq.s32.totalorder %s17, 0
      %p76 = por %p74, %p75
      %p77 = scmp.ne.s32.totalorder %s63, %s64
      %p78 = scmp.eq.s32.totalorder %s18, 1
      %p79 = por %p77, %p78
      %p81 = scmp.ne.s32.totalorder %s64, %s80
      %p82 = scmp.eq.s32.totalorder %s18, 0
      %p83 = por %p81, %p82
      %s84 = ssub.s32 %s20, %s27
      %p85 = scmp.eq.s32.totalorder %s84, 0
      %s87 = sadd.s32 %s86, 1
      %s88 = scalar_select %p85, %s86, %s87
      %p91 = pneg %p85
      %p92 = scmp.eq.s32.totalorder %s12, 1
      %p93 = por %p91, %p92
      %p94 = scmp.ne.s32.totalorder %s86, %s89
      %p95 = scmp.eq.s32.totalorder %s12, 0
      %p96 = por %p94, %p95
      %p97 = scmp.ne.s32.totalorder %s86, %s89
      %p98 = scmp.eq.s32.totalorder %s17, 1
      %p99 = por %p97, %p98
      %p100 = scmp.ne.s32.totalorder %s89, %s90
      %p101 = scmp.eq.s32.totalorder %s17, 0
      %p102 = por %p100, %p101
      %p103 = scmp.ne.s32.totalorder %s89, %s90
      %p104 = scmp.eq.s32.totalorder %s18, 1
      %p105 = por %p103, %p104
      %p107 = scmp.ne.s32.totalorder %s90, %s106
      %p108 = scmp.eq.s32.totalorder %s18, 0
      %p109 = por %p107, %p108
      %s110 = ssub.s32 %s19, %s31
      %s111 = ssub.s32 %s20, %s27
      %s112 = sor.u32 %s110, %s111
      %p113 = scmp.eq.s32.totalorder %s112, 0
      %s115 = sadd.s32 %s114, 1
      %s116 = scalar_select %p113, %s114, %s115
      %p119 = pneg %p113
      %p120 = scmp.eq.s32.totalorder %s12, 1
      %p121 = por %p119, %p120
      %p122 = scmp.ne.s32.totalorder %s114, %s117
      %p123 = scmp.eq.s32.totalorder %s12, 0
      %p124 = por %p122, %p123
      %p125 = scmp.ne.s32.totalorder %s114, %s117
      %p126 = scmp.eq.s32.totalorder %s17, 1
      %p127 = por %p125, %p126
      %p128 = scmp.ne.s32.totalorder %s117, %s118
      %p129 = scmp.eq.s32.totalorder %s17, 0
      %p130 = por %p128, %p129
      %p131 = scmp.ne.s32.totalorder %s117, %s118
      %p132 = scmp.eq.s32.totalorder %s18, 1
      %p133 = por %p131, %p132
      %p135 = scmp.ne.s32.totalorder %s118, %s134
      %p136 = scmp.eq.s32.totalorder %s18, 0
      %p137 = por %p135, %p136
      %p138 = scmp.le.s32.totalorder 1, %s12
      %p139 = scmp.lt.s32.totalorder %s12, 3
      %p140 = pnand %p138, %p139
      %p141 = pneg %p140
      // Predicated region
      $region9: #{patch_embed.1} parent=5 // pred_check
        _
      $region10: #{patch_embed.1} parent=5 // pred_check_branch
        %143 = sbr.rel (%p140) target = $region12
      $region11: #{patch_embed.1} parent=5 // pred_region
        %s144 = ssub.s32 %s12, 1
        // Predicated region
        $region13: #{patch_embed.1} parent=11 // pred_check
          %p145 = pneg %p76
        $region14: #{patch_embed.1} parent=11 // pred_check_branch
          %147 = sbr.rel (%p145) target = $region16
        $region15: #{patch_embed.1} parent=11 // pred_region
          %p148 = scmp.lt.s32.totalorder %s22, 0
          %s149 = scalar_select %p148, %s22, 0
          %s150 = smul.addr %s149, 4
          %s151 = scalar_lea.vmem %s1, %s150
        $region16: #{patch_embed.1} parent=11 // pred_fallthru
          _
        // Predicated region
        $region17: #{patch_embed.1} parent=11 // pred_check
          %p152 = pneg %p102
        $region18: #{patch_embed.1} parent=11 // pred_check_branch
          %154 = sbr.rel (%p152) target = $region20
        $region19: #{patch_embed.1} parent=11 // pred_region
          %p155 = scmp.lt.s32.totalorder %s22, 0
          %s156 = scalar_select %p155, %s22, 0
          %s157 = scalar_lea.vmem %s2, %s156
        $region20: #{patch_embed.1} parent=11 // pred_fallthru
          _
      $region12: #{patch_embed.1} parent=5 // pred_fallthru
        _
      %p158 = scmp.lt.s32.totalorder %s12, 2
      // Predicated region
      $region21: #{patch_embed.1} parent=5 // pred_check
        %p159 = pneg %p158
      $region22: #{patch_embed.1} parent=5 // pred_check_branch
        %161 = sbr.rel (%p159) target = $region24
      $region23: #{patch_embed.1} parent=5 // pred_region
        // Predicated region
        $region25: #{patch_embed.1} parent=23 // pred_check
          %p162 = pneg %p44
        $region26: #{patch_embed.1} parent=23 // pred_check_branch
          %164 = sbr.rel (%p162) target = $region28
        $region27: #{patch_embed.1} parent=23 // pred_region
          %s165 = smul.u32 2, %s19
          %p166 = scmp.lt.s32.totalorder %s165, 3
          %s167 = scalar_select %p166, %s165, 3
          %s168 = smul.addr %s167, 4
          %s169 = scalar_lea.vmem %s0, %s168
          %s170 = smul.u32 2, %s19
        $region28: #{patch_embed.1} parent=23 // pred_fallthru
          _
      $region24: #{patch_embed.1} parent=5 // pred_fallthru
        _
      %p171 = scmp.le.s32.totalorder 1, %s12
      %p172 = scmp.lt.s32.totalorder %s12, 3
      %p173 = pnand %p171, %p172
      %p174 = pneg %p173
      // Predicated region
      $region29: #{patch_embed.1} parent=5 // pred_check
        _
      $region30: #{patch_embed.1} parent=5 // pred_check_branch
        %176 = sbr.rel (%p173) target = $region32
      $region31: #{patch_embed.1} parent=5 // pred_region
        %s177 = ssub.s32 %s12, 1
        %s178 = smul.u32 2, %s21
        %p179 = scmp.lt.s32.totalorder %s178, 3
        %s180 = scalar_select %p179, %s178, 3
        %s181 = smul.addr %s180, 4
        %s182 = scalar_lea.vmem %s0, %s181
        %p183 = pneg %p50
        %p184 = pneg %p47
        %p185 = scmp.lt.s32.totalorder %s22, 0
        %s186 = scalar_select %p185, %s22, 0
        %s187 = smul.addr %s186, 4
        %s188 = scalar_lea.vmem %s1, %s187
        %p189 = pneg %p76
        %p190 = pneg %p73
        %p191 = scmp.lt.s32.totalorder %s22, 0
        %s192 = scalar_select %p191, %s22, 0
        %s193 = scalar_lea.vmem %s2, %s192
        %p194 = pneg %p102
        %p195 = pneg %p99
        %p196 = pneg %p130
        %p197 = pneg %p127
        %s198 = sand.u32 %s117, 1
        %s199 = scalar_lea.sflag [#allocation3], %s198
        %s200 = sand.u32 %s117, 1
        %s201 = smul.addr %s200, 16
        %s202 = scalar_lea.vmem [#allocation2], %s201
        %s203 = smul.u32 2, %s21
        %p204 = scmp.lt.s32.totalorder %s203, 3
        %s205 = scalar_select %p204, %s203, 3
        %s206 = smul.addr %s205, 4
        %s207 = scalar_lea.vmem %s0, %s206
        %s208 = smul.u32 2, %s21
        %p209 = scmp.lt.s32.totalorder %s22, 0
        %s210 = scalar_select %p209, %s22, 0
        %s211 = smul.addr %s210, 4
        %s212 = scalar_lea.vmem %s1, %s211
        %p213 = scmp.lt.s32.totalorder %s22, 0
        %s214 = scalar_select %p213, %s22, 0
        %s215 = scalar_lea.vmem %s2, %s214
        %s216 = smul.u32 2, %s21
        %v217 = vld [vmem:[%s207] sm:$0xf]
        %v218 = vld [vmem:[%s207 + $0x4] sm:$0xf]
        %v219 = vld [vmem:[%s212] sm:$0xf]
        %v220 = vld [vmem:[%s212 + $0x4] sm:$0xf]
        %v221 = vld [vmem:[%s212 + $0x8] sm:$0xf]
        %v222 = vld [vmem:[%s212 + $0xc] sm:$0xf]
        %v223 = vld [vmem:[%s212 + $0x10] sm:$0xf]
        %v224 = vld [vmem:[%s212 + $0x14] sm:$0xf]
        %v225 = vld [vmem:[%s212 + $0x18] sm:$0xf]
        %v226 = vld [vmem:[%s212 + $0x1c] sm:$0xf]
        %v227 = vld [vmem:[%s212 + $0x20] sm:$0xf]
        %v228 = vld [vmem:[%s212 + $0x24] sm:$0xf]
        %v229 = vld [vmem:[%s212 + $0x28] sm:$0xf]
        %v230 = vld [vmem:[%s212 + $0x2c] sm:$0xf]
        %v231 = vld [vmem:[%s212 + $0x30] sm:$0xf]
        %v232 = vld [vmem:[%s212 + $0x34] sm:$0xf]
        %v233 = vld [vmem:[%s212 + $0x38] sm:$0xf]
        %v234 = vld [vmem:[%s212 + $0x3c] sm:$0xf]
        %v235 = vld [vmem:[%s215] sm:$0x1]
        %v237 = vperm.slane %v235, 0
        %v241 = vunpack.c.l.b16 %v217
        %v242 = vunpack.c.l.b16 %v218
        %v243 = vpack.c.b16 %v242, %v241
        %v261 = vunpack.c.l.b16 %v219
        %v262 = vunpack.c.l.b16 %v220
        %v263 = vunpack.c.l.b16 %v221
        %v264 = vunpack.c.l.b16 %v222
        %v265 = vunpack.c.l.b16 %v223
        %v266 = vunpack.c.l.b16 %v224
        %v267 = vunpack.c.l.b16 %v225
        %v268 = vunpack.c.l.b16 %v226
        %v269 = vunpack.c.l.b16 %v227
        %v270 = vunpack.c.l.b16 %v228
        %v271 = vunpack.c.l.b16 %v229
        %v272 = vunpack.c.l.b16 %v230
        %v273 = vunpack.c.l.b16 %v231
        %v274 = vunpack.c.l.b16 %v232
        %v275 = vunpack.c.l.b16 %v233
        %v276 = vunpack.c.l.b16 %v234
        %v277 = vpack.c.b16 %v262, %v261
        %v278 = vpack.c.b16 %v264, %v263
        %v279 = vpack.c.b16 %v266, %v265
        %v280 = vpack.c.b16 %v268, %v267
        %v281 = vpack.c.b16 %v270, %v269
        %v282 = vpack.c.b16 %v272, %v271
        %v283 = vpack.c.b16 %v274, %v273
        %v284 = vpack.c.b16 %v276, %v275
        %293 = vmatpush.bf16.msra.mxu0 %v284
        %294 = vmatpush.bf16.msra.mxu0 %v283
        %295 = vmatpush.bf16.msra.mxu0 %v282
        %296 = vmatpush.bf16.msra.mxu0 %v281
        %297 = vmatpush.bf16.msra.mxu0 %v280
        %298 = vmatpush.bf16.msra.mxu0 %v279
        %299 = vmatpush.bf16.msra.mxu0 %v278
        %300 = vmatpush.bf16.msra.mxu0 %v277
        %301 = vmatmul.bf16.gmra.mxu0 %v243
        %v302 = vpop.f32.mrf.mxu0
        %v303 = vadd.f32 %v237, %v302
        %v304 = vpop.f32.mrf.mxu0
        %v305 = vadd.f32 %v237, %v304
        %306 = vdwg.mxu0
        %307 = vst [vmem:[%s202] sm:$0xff] %v303
        %308 = vst [vmem:[%s202 + $0x8] sm:$0xff] %v305
        %s309 = sand.u32 %s117, 1
        %s310 = scalar_lea.sflag [#allocation3], %s309
        %s311 = sand.u32 %s117, 1
        %s312 = smul.addr %s311, 16
        %s313 = scalar_lea.vmem [#allocation2], %s312
        // Predicated region
        $region33: #{patch_embed.1} parent=31 // pred_check
          %p314 = pneg %p127
        $region34: #{patch_embed.1} parent=31 // pred_check_branch
          %316 = sbr.rel (%p314) target = $region36
        $region35: #{patch_embed.1} parent=31 // pred_region
          %s317 = smul.u32 2, %s21
          %319 = vsyncadd %s310, 0
          %s320 = sadd.s32 %s22, %s317
          %s321 = smul.addr %s320, 8
          %s322 = scalar_lea.hbm %s3, %s321
          %s323 = sshll.u32 %s313, 4
          %s324 = int_to_ptr.vmem [resolvable:$true] %s323
          %s325 = sshll.u32 %s322, 4
          %s326 = int_to_ptr.hbm [resolvable:$true] %s325
          %331 = dma.vmem_to_hbm [thread:$0]  %s324, 256, %s326, %s310, 128, 128, 8
        $region36: #{patch_embed.1} parent=31 // pred_fallthru
          _
      $region32: #{patch_embed.1} parent=5 // pred_fallthru
        _
      %p332 = scmp.le.s32.totalorder 2, %s12
      // Predicated region
      $region37: #{patch_embed.1} parent=5 // pred_check
        %p333 = pneg %p332
      $region38: #{patch_embed.1} parent=5 // pred_check_branch
        %335 = sbr.rel (%p333) target = $region40
      $region39: #{patch_embed.1} parent=5 // pred_region
        %s336 = ssub.s32 %s12, 2
        // Predicated region
        $region41: #{patch_embed.1} parent=39 // pred_check
          %p337 = pneg %p133
        $region42: #{patch_embed.1} parent=39 // pred_check_branch
          %339 = sbr.rel (%p337) target = $region44
        $region43: #{patch_embed.1} parent=39 // pred_region
          %s340 = sand.u32 %s118, 1
          %s341 = scalar_lea.sflag [#allocation3], %s340
          %s342 = sand.u32 %s118, 1
          %s343 = smul.addr %s342, 16
          %s344 = scalar_lea.vmem [#allocation2], %s343
          %346 = dma.done %s341, 256
        $region44: #{patch_embed.1} parent=39 // pred_fallthru
          _
      $region40: #{patch_embed.1} parent=5 // pred_fallthru
        _
    $region6: #{patch_embed.1} parent=1 // loop_footer
      %s16 = sadd.s32 1, %s12
    $region7: #{patch_embed.1} parent=1 // loop_footer_branch
      %11 = sbr.rel target = $region3
    $region8: #{patch_embed.1} parent=1 // loop_exit
      _
    %347 = vsyncpa [#allocation3], 1
    %s348 = scalar_lea.sflag [#allocation3], 1
    %349 = vsyncpa %s348, 1

</llo_original>
